<compile_context>
chip_gen: v7x
topology: tpu7x:2x2x1
jax: 0.10.0
libtpu: 0.0.40
codegen_flags: <defaults>
</compile_context>

<pallas_src>
import jax
import jax.numpy as jnp
from jax.experimental import pallas as pl
from jax.experimental.pallas import tpu as pltpu

_LANE = 128
_SUBLANE = 8


def _round_up(n: int, m: int) -> int:
    return -(-n // m) * m


def _physical_vmem_bytes() -> int:
    """Best-effort per-chip VMEM query; fall back to the smallest (v7x, 64 MiB)."""
    try:
        return int(pltpu.get_tpu_info().vmem_capacity_bytes)
    except Exception:
        return 64 * 1024 * 1024


def mlp_kernel(x_ref, w1_ref, b1_ref, w2_ref, b2_ref, o_ref):
    """fc1 -> ReLU -> fc2 on one (TM, D_in) batch tile; weights stay VMEM-resident."""
    # In-kernel cast of the streamed x tile to the MXU compute dtype (rides the
    # free VPU slots under the MXU; avoids a wrapper-side HBM pass).
    x = x_ref[...].astype(w1_ref.dtype)
    # fc1: bf16 operands, f32 MXU accumulation.
    h = jnp.dot(x, w1_ref[...], preferred_element_type=jnp.float32)
    # Bias add + ReLU in f32 (v5e's VPU has no bf16 path).
    h = jnp.maximum(h + b1_ref[...], 0.0)
    # fc2: downcast only the MXU operand; the accumulator stays f32.
    y = jnp.dot(h.astype(w2_ref.dtype), w2_ref[...],
                preferred_element_type=jnp.float32)
    o_ref[...] = (y + b2_ref[...]).astype(o_ref.dtype)


def mlp_forward(x, w1, b1, w2, b2, *, block_m=512,
                compute_dtype=jnp.bfloat16, out_dtype=jnp.float32,
                trim_output=True):
    """x: (B, D_in); w1: (D_in, H); b1: (1, H); w2: (H, D_out); b2: (1, D_out).

    Returns (B, D_out) in `out_dtype` (f32 by default; matches the f32 PyTorch
    module up to bf16 rounding of the matmul operands). With trim_output=False
    the lane/batch-padded slab is returned (rows >= B / cols >= D_out are junk).
    """
    B, D_in = x.shape
    H = w1.shape[1]
    D_out = w2.shape[1]
    d_out_pad = _round_up(D_out, _LANE)           # lane-dense output stores

    # ---- Batch tiling: minimal padding, multiple of 8 sublanes, and >= 2 grid
    # steps when the batch allows it so both v7x TensorCores get work.
    min_tiles = 2 if B >= 2 * _SUBLANE else 1
    num_tiles = max(pl.cdiv(B, block_m), min_tiles)
    tm = _round_up(pl.cdiv(B, num_tiles), _SUBLANE)

    # ---- VMEM budget check (resident weights single-buffered, x/out tiles
    # double-buffered, f32 intermediate h, plus slack).
    phys_vmem = _physical_vmem_bytes()
    budget = int(phys_vmem * 0.75)
    cd_bytes = jnp.dtype(compute_dtype).itemsize
    x_bytes = jnp.dtype(x.dtype).itemsize
    o_bytes = jnp.dtype(out_dtype).itemsize
    resident = (D_in * H + H * d_out_pad) * cd_bytes + (H + d_out_pad) * 4

    def footprint(tm_):
        return (resident
                + 2 * tm_ * D_in * x_bytes          # x tile, double-buffered
                + 2 * tm_ * d_out_pad * o_bytes     # out tile, double-buffered
                + tm_ * H * 4                       # f32 intermediate h
                + (2 << 20))                        # compute / regalloc slack

    # TODO(synk): when the resident bf16 weights alone exceed the budget (huge
    # D_in/H on v7x's 64 MiB VMEM), fall back to tiling H / D_out over extra
    # grid axes with an f32 VMEM accumulator instead of full weight residency.
    assert resident <= budget, (
        f"resident weights ({resident} B) exceed the VMEM budget ({budget} B)")
    while tm > _SUBLANE and footprint(tm) > budget:
        tm = _round_up(tm // 2, _SUBLANE)

    b_pad = _round_up(B, tm)
    num_tiles = b_pad // tm

    vmem_limit = int(min(max(2 * footprint(tm), 16 << 20), phys_vmem * 0.9))

    # ---- Wrapper-side data prep (weights are one-time; x is only padded if
    # actually needed and is NOT cast here — the kernel casts the tile).
    x_in = x if b_pad == B else jnp.pad(x, ((0, b_pad - B), (0, 0)))
    w1_c = w1.astype(compute_dtype)
    b1_r = jnp.asarray(b1, jnp.float32).reshape(1, H)
    w2_p = jnp.pad(w2, ((0, 0), (0, d_out_pad - D_out))).astype(compute_dtype)
    b2_p = jnp.pad(jnp.asarray(b2, jnp.float32).reshape(1, D_out),
                   ((0, 0), (0, d_out_pad - D_out)))

    flops = 2 * b_pad * (D_in * H + H * d_out_pad)
    bytes_accessed = (x_in.size * x_in.dtype.itemsize
                      + w1_c.size * w1_c.dtype.itemsize
                      + w2_p.size * w2_p.dtype.itemsize
                      + (H + d_out_pad) * 4
                      + b_pad * d_out_pad * o_bytes)

    out = pl.pallas_call(
        mlp_kernel,
        out_shape=jax.ShapeDtypeStruct((b_pad, d_out_pad), out_dtype),
        grid_spec=pltpu.PrefetchScalarGridSpec(
            num_scalar_prefetch=0,
            grid=(num_tiles,),
            in_specs=[
                pl.BlockSpec((tm, D_in), lambda i: (i, 0)),        # x: streamed
                pl.BlockSpec((D_in, H), lambda i: (0, 0),
                             pipeline_mode=pl.Buffered(1)),        # w1: resident
                pl.BlockSpec((1, H), lambda i: (0, 0),
                             pipeline_mode=pl.Buffered(1)),        # b1: resident
                pl.BlockSpec((H, d_out_pad), lambda i: (0, 0),
                             pipeline_mode=pl.Buffered(1)),        # w2: resident
                pl.BlockSpec((1, d_out_pad), lambda i: (0, 0),
                             pipeline_mode=pl.Buffered(1)),        # b2: resident
            ],
            out_specs=pl.BlockSpec((tm, d_out_pad), lambda i: (i, 0)),
        ),
        compiler_params=pltpu.CompilerParams(
            dimension_semantics=("parallel",),
            vmem_limit_bytes=vmem_limit,
        ),
        cost_estimate=pl.CostEstimate(
            flops=flops, transcendentals=0, bytes_accessed=bytes_accessed),
    )(x_in, w1_c, b1_r, w2_p, b2_p)

    if trim_output:
        return out[:B, :D_out]
    return out


def init_mlp_params(key, input_dim, hidden_dim, output_dim, dtype=jnp.float32):
    """Deterministic init mimicking PyTorch nn.Linear default U[-1/sqrt(in), 1/sqrt(in)]."""
    k1, k2, k3, k4 = jax.random.split(key, 4)
    bound1 = 1.0 / jnp.sqrt(input_dim)
    bound2 = 1.0 / jnp.sqrt(hidden_dim)
    # Stored already transposed: (in_features, out_features).
    w1 = jax.random.uniform(k1, (input_dim, hidden_dim), dtype, -bound1, bound1)
    b1 = jax.random.uniform(k2, (1, hidden_dim), dtype, -bound1, bound1)
    w2 = jax.random.uniform(k3, (hidden_dim, output_dim), dtype, -bound2, bound2)
    b2 = jax.random.uniform(k4, (1, output_dim), dtype, -bound2, bound2)
    return w1, b1, w2, b2


if __name__ == "__main__":
    input_dim, hidden_dim, output_dim = 16, 32, 2
    batch = 8

    key = jax.random.PRNGKey(0)
    kx, kp = jax.random.split(key)
    x = jax.random.normal(kx, (batch, input_dim), jnp.float32)
    w1, b1, w2, b2 = init_mlp_params(kp, input_dim, hidden_dim, output_dim)

    out = mlp_forward(x, w1, b1, w2, b2)
    out = jax.block_until_ready(out)
    assert out.shape == (batch, output_dim)

    # Matched-precision reference (bf16 MXU operands, f32 accumulation / elementwise).
    bf16 = jnp.bfloat16
    h_ref = jnp.maximum(
        jnp.dot(x.astype(bf16), w1.astype(bf16),
                preferred_element_type=jnp.float32) + b1, 0.0)
    ref = jnp.dot(h_ref.astype(bf16), w2.astype(bf16),
                  preferred_element_type=jnp.float32) + b2
    assert jnp.allclose(out, ref, atol=1e-3, rtol=1e-3)

    # Loose check against full-f32 module semantics (bf16 operand rounding only).
    ref_f32 = jnp.maximum(x @ w1 + b1, 0.0) @ w2 + b2
    assert jnp.allclose(out, ref_f32, atol=5e-2, rtol=5e-2)

    print("KERNEL_OK")
</pallas_src>

<mosaic_0001>
module attributes {stable_mosaic.version = 11 : i64} {
  func.func @mlp_kernel(%arg0: i32, %arg1: memref<8x16xf32, #tpu.memory_space<vmem>>, %arg2: memref<16x32xbf16, #tpu.memory_space<vmem>>, %arg3: memref<1x32xf32, #tpu.memory_space<vmem>>, %arg4: memref<32x128xbf16, #tpu.memory_space<vmem>>, %arg5: memref<1x128xf32, #tpu.memory_space<vmem>>, %arg6: memref<8x128xf32, #tpu.memory_space<vmem>>) attributes {dimension_semantics = [#tpu.dimension_semantics<parallel>], iteration_bounds = array<i64: 1>, scalar_prefetch = 0 : i64, scratch_operands = 0 : i64, tpu.core_type = #tpu.core_type<tc>, window_params = [{transform_indices = @transform_0, window_bounds = array<i64: 8, 16>}, {pipeline_mode = #tpu.pipeline_mode<synchronous>, transform_indices = @transform_1, window_bounds = array<i64: 16, 32>}, {pipeline_mode = #tpu.pipeline_mode<synchronous>, transform_indices = @transform_2, window_bounds = array<i64: 1, 32>}, {pipeline_mode = #tpu.pipeline_mode<synchronous>, transform_indices = @transform_3, window_bounds = array<i64: 32, 128>}, {pipeline_mode = #tpu.pipeline_mode<synchronous>, transform_indices = @transform_4, window_bounds = array<i64: 1, 128>}, {transform_indices = @transform_5, window_bounds = array<i64: 8, 128>}]} {
    %c0 = arith.constant 0 : index
    %c0_0 = arith.constant 0 : index
    %0 = vector.load %arg1[%c0, %c0_0] : memref<8x16xf32, #tpu.memory_space<vmem>>, vector<8x16xf32>
    %1 = arith.truncf %0 : vector<8x16xf32> to vector<8x16xbf16>
    %c0_1 = arith.constant 0 : index
    %c0_2 = arith.constant 0 : index
    %2 = vector.load %arg2[%c0_1, %c0_2] : memref<16x32xbf16, #tpu.memory_space<vmem>>, vector<16x32xbf16>
    %cst = arith.constant dense<0.000000e+00> : vector<8x32xf32>
    %3 = tpu.matmul %1, %2, %cst {dimension_numbers = #tpu.dot_dimension_numbers<[1], [0], [0], [1], [0, 0, 1, 1], [], []>} : vector<8x16xbf16>, vector<16x32xbf16>, vector<8x32xf32> -> vector<8x32xf32>
    %c0_3 = arith.constant 0 : index
    %c0_4 = arith.constant 0 : index
    %4 = vector.load %arg3[%c0_3, %c0_4] : memref<1x32xf32, #tpu.memory_space<vmem>>, vector<1x32xf32>
    %5 = vector.broadcast %4 : vector<1x32xf32> to vector<8x32xf32>
    %6 = arith.addf %3, %5 : vector<8x32xf32>
    %cst_5 = arith.constant 0.000000e+00 : f32
    %7 = vector.broadcast %cst_5 : f32 to vector<8x32xf32>
    %8 = arith.maximumf %6, %7 : vector<8x32xf32>
    %9 = arith.truncf %8 : vector<8x32xf32> to vector<8x32xbf16>
    %c0_6 = arith.constant 0 : index
    %c0_7 = arith.constant 0 : index
    %10 = vector.load %arg4[%c0_6, %c0_7] : memref<32x128xbf16, #tpu.memory_space<vmem>>, vector<32x128xbf16>
    %cst_8 = arith.constant dense<0.000000e+00> : vector<8x128xf32>
    %11 = tpu.matmul %9, %10, %cst_8 {dimension_numbers = #tpu.dot_dimension_numbers<[1], [0], [0], [1], [0, 0, 1, 1], [], []>} : vector<8x32xbf16>, vector<32x128xbf16>, vector<8x128xf32> -> vector<8x128xf32>
    %c0_9 = arith.constant 0 : index
    %c0_10 = arith.constant 0 : index
    %12 = vector.load %arg5[%c0_9, %c0_10] : memref<1x128xf32, #tpu.memory_space<vmem>>, vector<1x128xf32>
    %13 = vector.broadcast %12 : vector<1x128xf32> to vector<8x128xf32>
    %14 = arith.addf %11, %13 : vector<8x128xf32>
    %c0_11 = arith.constant 0 : index
    %c0_12 = arith.constant 0 : index
    %15 = vector.load %arg6[%c0_11, %c0_12] : memref<8x128xf32, #tpu.memory_space<vmem>>, vector<8x128xf32>
    tpu.vector_store %arg6[%c0_11, %c0_12], %14 {strides = array<i32>} : memref<8x128xf32, #tpu.memory_space<vmem>>, vector<8x128xf32>,
    return
  }
  func.func @transform_0(%arg0: i32) -> (i32, i32) {
    %c0_i32 = arith.constant 0 : i32
    %c0_i32_0 = arith.constant 0 : i32
    return %arg0, %c0_i32 : i32, i32
  }
  func.func @transform_1(%arg0: i32) -> (i32, i32) {
    %c0_i32 = arith.constant 0 : i32
    %c0_i32_0 = arith.constant 0 : i32
    %c0_i32_1 = arith.constant 0 : i32
    return %c0_i32, %c0_i32_0 : i32, i32
  }
  func.func @transform_2(%arg0: i32) -> (i32, i32) {
    %c0_i32 = arith.constant 0 : i32
    %c0_i32_0 = arith.constant 0 : i32
    %c0_i32_1 = arith.constant 0 : i32
    return %c0_i32, %c0_i32_0 : i32, i32
  }
  func.func @transform_3(%arg0: i32) -> (i32, i32) {
    %c0_i32 = arith.constant 0 : i32
    %c0_i32_0 = arith.constant 0 : i32
    %c0_i32_1 = arith.constant 0 : i32
    return %c0_i32, %c0_i32_0 : i32, i32
  }
  func.func @transform_4(%arg0: i32) -> (i32, i32) {
    %c0_i32 = arith.constant 0 : i32
    %c0_i32_0 = arith.constant 0 : i32
    %c0_i32_1 = arith.constant 0 : i32
    return %c0_i32, %c0_i32_0 : i32, i32
  }
  func.func @transform_5(%arg0: i32) -> (i32, i32) {
    %c0_i32 = arith.constant 0 : i32
    %c0_i32_0 = arith.constant 0 : i32
    return %arg0, %c0_i32 : i32, i32
  }
}

</mosaic_0001>

<llo_original>
// kernel: tpu_custom_call.1
$region0: #{tpu_custom_call.1}
  #allocation0 [shape = 'u32[]', space=smem, size = 0x4, offset = 0x4, fixed_abs, tag = 'smem constant byte address 0x4 - core index']
  #allocation1 [shape = 'u32[144,128]{1,0:T(1,128)}', space=vmem, size = 0x12000, scoped, tag = 'internal scratch']
  %s0 = inlined_call_operand.hbm [shape: f32[8,16], index: 0, kind: input, shape index: {}]
  %s1 = inlined_call_operand.hbm [shape: bf16[16,32], index: 1, kind: input, shape index: {}]
  %s2 = inlined_call_operand.vmem [shape: f32[1,32], index: 2, kind: input, shape index: {}]
  %s3 = inlined_call_operand.hbm [shape: bf16[32,128], index: 3, kind: input, shape index: {}]
  %s4 = inlined_call_operand.vmem [shape: f32[1,128], index: 4, kind: input, shape index: {}]
  %s5 = inlined_call_operand.hbm [shape: f32[8,128], index: 5, kind: output, shape index: {}]
  %s6 = sld [smem:[#allocation0]]
  $region42: #{tpu_custom_call.1} parent=0
    _
  %s8 = ssub.s32 1, %s6
  %s9 = scalar_select 0, %s8, %s6
  $region1: #{tpu_custom_call.1} parent=0
    #allocation2 [shape = 'u8[4096]{0}', space=vmem, size = 0x1000, scoped, tag = 'input window, operand 0, single buffered']
    #allocation3 [shape = 's32[1]{0}', space=sflag, size = 0x4, scoped, tag = 'scoped memory for tpu_custom_call.1']
    #allocation4 [shape = 's32[1]{0}', space=sflag, size = 0x4, scoped, tag = 'scoped memory for tpu_custom_call.1']
    #allocation5 [shape = 'u8[4096]{0}', space=vmem, size = 0x1000, scoped, tag = 'input window, operand 1, single buffered']
    #allocation6 [shape = 's32[1]{0}', space=sflag, size = 0x4, scoped, tag = 'scoped memory for tpu_custom_call.1']
    #allocation7 [shape = 'u8[8192]{0}', space=vmem, size = 0x2000, scoped, tag = 'input window, operand 3, single buffered']
    #allocation8 [shape = 'u8[4096]{0}', space=vmem, size = 0x1000, scoped, tag = 'output window, operand 0, single buffered']
    %10 = vsyncpa [#allocation3], 0
    %11 = vsyncpa [#allocation6], 0
    %12 = vsyncpa [#allocation4], 0
    // Predicated region
    $region2: #{tpu_custom_call.1} parent=1 // pred_check
      _
    $region3: #{tpu_custom_call.1} parent=1 // pred_check_branch
      %14 = sbr.rel (0) target = $region5
    $region4: #{tpu_custom_call.1} parent=1 // pred_region
      %s16 = ssub.s32 128, 128
      %17 = vsyncadd [#allocation3], %s16
      %s19 = sshll.u32 [#allocation2], 4
      %s20 = int_to_ptr.vmem [resolvable:$true] %s19
      %22 = dma.hbm_to_vmem [thread:$0]  %s0, 128, %s20, [#allocation3]
    $region5: #{tpu_custom_call.1} parent=1 // pred_fallthru
      _
    // Predicated region
    $region6: #{tpu_custom_call.1} parent=1 // pred_check
      _
    $region7: #{tpu_custom_call.1} parent=1 // pred_check_branch
      %24 = sbr.rel (0) target = $region9
    $region8: #{tpu_custom_call.1} parent=1 // pred_region
      %s26 = ssub.s32 128, 128
      %27 = vsyncadd [#allocation6], %s26
      %s28 = sshll.u32 [#allocation5], 4
      %s29 = int_to_ptr.vmem [resolvable:$true] %s28
      %34 = dma.hbm_to_vmem [thread:$0]  %s1, 128, %s29, [#allocation6], 64, 64, 4
    $region9: #{tpu_custom_call.1} parent=1 // pred_fallthru
      _
    // Predicated region
    $region10: #{tpu_custom_call.1} parent=1 // pred_check
      _
    $region11: #{tpu_custom_call.1} parent=1 // pred_check_branch
      %36 = sbr.rel (0) target = $region13
    $region12: #{tpu_custom_call.1} parent=1 // pred_region
      _
    $region13: #{tpu_custom_call.1} parent=1 // pred_fallthru
      _
    // Predicated region
    $region14: #{tpu_custom_call.1} parent=1 // pred_check
      _
    $region15: #{tpu_custom_call.1} parent=1 // pred_check_branch
      %38 = sbr.rel (0) target = $region17
    $region16: #{tpu_custom_call.1} parent=1 // pred_region
      %s40 = ssub.s32 256, 256
      %41 = vsyncadd [#allocation6], %s40
      %s42 = sshll.u32 [#allocation7], 4
      %s43 = int_to_ptr.vmem [resolvable:$true] %s42
      %48 = dma.hbm_to_vmem [thread:$0]  %s3, 256, %s43, [#allocation6], 64, 64, 4
    $region17: #{tpu_custom_call.1} parent=1 // pred_fallthru
      _
    // Predicated region
    $region18: #{tpu_custom_call.1} parent=1 // pred_check
      _
    $region19: #{tpu_custom_call.1} parent=1 // pred_check_branch
      %50 = sbr.rel (0) target = $region21
    $region20: #{tpu_custom_call.1} parent=1 // pred_region
      _
    $region21: #{tpu_custom_call.1} parent=1 // pred_fallthru
      _
    // Predicated region
    $region22: #{tpu_custom_call.1} parent=1 // pred_check
      _
    $region23: #{tpu_custom_call.1} parent=1 // pred_check_branch
      %52 = sbr.rel (0) target = $region25
    $region24: #{tpu_custom_call.1} parent=1 // pred_region
      %53 = dma.done [#allocation3], 128
    $region25: #{tpu_custom_call.1} parent=1 // pred_fallthru
      _
    // Predicated region
    $region26: #{tpu_custom_call.1} parent=1 // pred_check
      _
    $region27: #{tpu_custom_call.1} parent=1 // pred_check_branch
      %55 = sbr.rel (0) target = $region29
    $region28: #{tpu_custom_call.1} parent=1 // pred_region
      %56 = dma.done [#allocation6], 128
    $region29: #{tpu_custom_call.1} parent=1 // pred_fallthru
      _
    // Predicated region
    $region30: #{tpu_custom_call.1} parent=1 // pred_check
      _
    $region31: #{tpu_custom_call.1} parent=1 // pred_check_branch
      %58 = sbr.rel (0) target = $region33
    $region32: #{tpu_custom_call.1} parent=1 // pred_region
      %59 = dma.done [#allocation6], 256
    $region33: #{tpu_custom_call.1} parent=1 // pred_fallthru
      _
    %v61 = vld [vmem:[#allocation2] sm:$0xff]
    %v62 = vpack.c.bf16 %v61, %v61
    %v63 = vld [vmem:[#allocation5] sm:$0xf]
    %v64 = vld [vmem:[#allocation5 + $0x4] sm:$0xf]
    %v65 = vld [vmem:[%s2] sm:$0x1]
    %v67 = vlaneseq
    %v68 = vshrl.u32 %v67, 7
    %v69 = vsub.s32 0, %v68
    %v70 = vrot.slane %v65, %v69
    %v74 = vunpack.c.l.b16 %v63
    %v75 = vunpack.c.l.b16 %v64
    %v76 = vpack.c.b16 %v75, %v74
    %vm78 = vcmask 130048
    %v80 = vsel %vm78, %v62, 0
    %82 = vmatprep.subr.bf16.mxu0 0
    %83 = vmatpush1.bf16.msra.mxu0 %v76
    %84 = vmatprep.subr.bf16.mxu0 0
    %85 = vmatpush1.bf16.msra.mxu0 0
    %86 = vmatprep.subr.bf16.mxu0 0
    %87 = vmatpush1.bf16.msra.mxu0 0
    %88 = vmatprep.subr.bf16.mxu0 0
    %89 = vmatpush1.bf16.msra.mxu0 0
    %90 = vmatprep.subr.bf16.mxu0 0
    %91 = vmatpush1.bf16.msra.mxu0 0
    %92 = vmatprep.subr.bf16.mxu0 0
    %93 = vmatpush1.bf16.msra.mxu0 0
    %94 = vmatprep.subr.bf16.mxu0 0
    %95 = vmatpush1.bf16.msra.mxu0 0
    %96 = vmatprep.subr.bf16.mxu0 0
    %97 = vmatpush1.bf16.msra.mxu0 0
    %98 = vmatprep.subr.bf16.mxu0 0
    %99 = vmatpush1.bf16.msra.mxu0 0
    %100 = vmatprep.subr.bf16.mxu0 0
    %101 = vmatpush1.bf16.msra.mxu0 0
    %102 = vmatprep.subr.bf16.mxu0 0
    %103 = vmatpush1.bf16.msra.mxu0 0
    %104 = vmatprep.subr.bf16.mxu0 0
    %105 = vmatpush1.bf16.msra.mxu0 0
    %106 = vmatprep.subr.bf16.mxu0 0
    %107 = vmatpush1.bf16.msra.mxu0 0
    %108 = vmatprep.subr.bf16.mxu0 0
    %109 = vmatpush1.bf16.msra.mxu0 0
    %110 = vmatprep.subr.bf16.mxu0 0
    %111 = vmatpush1.bf16.msra.mxu0 0
    %112 = vmatprep.subr.bf16.mxu0 0
    %113 = vmatpush1.bf16.msra.mxu0 0
    %114 = vmatprep.mubr.bf16.mxu0 0
    %115 = vmatmul.mubr.bf16.gmra.mrb[0].mxu0 %v80
    %v116 = vpop.f32.mrb[0].mxu0
    %v117 = vadd.f32 %v70, %v116
    %v118 = vpop.f32.mrb[0].mxu0
    %v119 = vpop.f32.mrb[0].mxu0
    %v120 = vpop.f32.mrb[0].mxu0
    %121 = vdwg.mxu0
    %v122 = vmax.f32 %v117, 0.0
    %v123 = vpack.c.bf16 %v122, %v122
    %v124 = vld [vmem:[#allocation7] sm:$0xf]
    %v125 = vld [vmem:[#allocation7 + $0x4] sm:$0xf]
    %v126 = vld [vmem:[#allocation7 + $0x8] sm:$0xf]
    %v127 = vld [vmem:[#allocation7 + $0xc] sm:$0xf]
    %v128 = vld [vmem:[%s4] sm:$0x1]
    %v130 = vlaneseq
    %v131 = vshrl.u32 %v130, 7
    %v132 = vsub.s32 0, %v131
    %v133 = vrot.slane %v128, %v132
    %v139 = vunpack.c.l.b16 %v124
    %v140 = vunpack.c.l.b16 %v125
    %v141 = vunpack.c.l.b16 %v126
    %v142 = vunpack.c.l.b16 %v127
    %v143 = vpack.c.b16 %v140, %v139
    %v144 = vpack.c.b16 %v142, %v141
    %vm147 = vcmask 261120
    %v149 = vsel %vm147, %v123, 0
    %151 = vmatprep.subr.bf16.mxu0 0
    %152 = vmatpush1.bf16.msra.mxu0 %v143
    %153 = vmatprep.subr.bf16.mxu0 0
    %154 = vmatpush1.bf16.msra.mxu0 %v144
    %155 = vmatprep.subr.bf16.mxu0 0
    %156 = vmatpush1.bf16.msra.mxu0 0
    %157 = vmatprep.subr.bf16.mxu0 0
    %158 = vmatpush1.bf16.msra.mxu0 0
    %159 = vmatprep.subr.bf16.mxu0 0
    %160 = vmatpush1.bf16.msra.mxu0 0
    %161 = vmatprep.subr.bf16.mxu0 0
    %162 = vmatpush1.bf16.msra.mxu0 0
    %163 = vmatprep.subr.bf16.mxu0 0
    %164 = vmatpush1.bf16.msra.mxu0 0
    %165 = vmatprep.subr.bf16.mxu0 0
    %166 = vmatpush1.bf16.msra.mxu0 0
    %167 = vmatprep.subr.bf16.mxu0 0
    %168 = vmatpush1.bf16.msra.mxu0 0
    %169 = vmatprep.subr.bf16.mxu0 0
    %170 = vmatpush1.bf16.msra.mxu0 0
    %171 = vmatprep.subr.bf16.mxu0 0
    %172 = vmatpush1.bf16.msra.mxu0 0
    %173 = vmatprep.subr.bf16.mxu0 0
    %174 = vmatpush1.bf16.msra.mxu0 0
    %175 = vmatprep.subr.bf16.mxu0 0
    %176 = vmatpush1.bf16.msra.mxu0 0
    %177 = vmatprep.subr.bf16.mxu0 0
    %178 = vmatpush1.bf16.msra.mxu0 0
    %179 = vmatprep.subr.bf16.mxu0 0
    %180 = vmatpush1.bf16.msra.mxu0 0
    %181 = vmatprep.subr.bf16.mxu0 0
    %182 = vmatpush1.bf16.msra.mxu0 0
    %183 = vmatprep.mubr.bf16.mxu0 0
    %184 = vmatmul.mubr.bf16.gmra.mrb[0].mxu0 %v149
    %v185 = vpop.f32.mrb[0].mxu0
    %v186 = vadd.f32 %v133, %v185
    %v187 = vpop.f32.mrb[0].mxu0
    %v188 = vpop.f32.mrb[0].mxu0
    %v189 = vpop.f32.mrb[0].mxu0
    %190 = vdwg.mxu0
    %191 = vst [vmem:[#allocation8] sm:$0xff] %v186
    // Predicated region
    $region34: #{tpu_custom_call.1} parent=1 // pred_check
      _
    $region35: #{tpu_custom_call.1} parent=1 // pred_check_branch
      %193 = sbr.rel (0) target = $region37
    $region36: #{tpu_custom_call.1} parent=1 // pred_region
      %s195 = ssub.s32 128, 128
      %196 = vsyncadd [#allocation4], %s195
      %s198 = sshll.u32 [#allocation8], 4
      %s199 = int_to_ptr.vmem [resolvable:$true] %s198
      %201 = dma.vmem_to_hbm [thread:$0]  %s199, 128, %s5, [#allocation4]
    $region37: #{tpu_custom_call.1} parent=1 // pred_fallthru
      _
    // Predicated region
    $region38: #{tpu_custom_call.1} parent=1 // pred_check
      _
    $region39: #{tpu_custom_call.1} parent=1 // pred_check_branch
      %203 = sbr.rel (0) target = $region41
    $region40: #{tpu_custom_call.1} parent=1 // pred_region
      %204 = dma.done [#allocation4], 128
    $region41: #{tpu_custom_call.1} parent=1 // pred_fallthru
      _
    %205 = vsyncpa [#allocation3], 1
    %206 = vsyncpa [#allocation6], 1
    %207 = vsyncpa [#allocation4], 1

</llo_original>
